<compile_context>
chip_gen: v7x
topology: tpu7x:2x2x1
jax: 0.10.0
libtpu: 0.0.40
codegen_flags: <defaults>
</compile_context>

<pallas_src>
import functools

import jax
import jax.numpy as jnp
from jax.experimental import pallas as pl
from jax.experimental.pallas import tpu as pltpu

LANE = 128
SUBLANE = 8


def _round_up(x, m):
    return (x + m - 1) // m * m


def dbn_kernel(x_ref, w1_ref, b1_ref, w2_ref, b2_ref, w3_ref, b3_ref, o_ref):
    # Layer 1: bf16 operands on the MXU, f32 accumulation; bias + sigmoid in f32.
    h1 = jax.nn.sigmoid(
        jnp.dot(x_ref[...], w1_ref[...], preferred_element_type=jnp.float32)
        + b1_ref[...]
    )
    # Layer 2
    h2 = jax.nn.sigmoid(
        jnp.dot(h1.astype(w2_ref.dtype), w2_ref[...],
                preferred_element_type=jnp.float32)
        + b2_ref[...]
    )
    # Output layer
    o_ref[...] = jax.nn.sigmoid(
        jnp.dot(h2.astype(w3_ref.dtype), w3_ref[...],
                preferred_element_type=jnp.float32)
        + b3_ref[...]
    ).astype(o_ref.dtype)


def prepare_params(params, compute_dtype=jnp.bfloat16):
    """One-time layout prep (do OUTSIDE the per-step path):
    transpose PyTorch (out,in) weights to (in,out), zero-pad all N dims (and the
    matching K dims of the next layer) to multiples of 128 lanes, cast matmul
    operands to bf16. Biases stay f32 (added post-accumulation)."""
    w1, b1 = params["fc1_w"], params["fc1_b"]   # (H1, V1), (H1,)
    w2, b2 = params["fc2_w"], params["fc2_b"]   # (H2, H1), (H2,)
    w3, b3 = params["out_w"], params["out_b"]   # (O,  H2), (O,)

    V1 = w1.shape[1]
    H1, H2, O = w1.shape[0], w2.shape[0], w3.shape[0]
    H1p, H2p, Op = _round_up(H1, LANE), _round_up(H2, LANE), _round_up(O, LANE)

    def pad2(a, rows, cols):
        return jnp.pad(a, ((0, rows - a.shape[0]), (0, cols - a.shape[1])))

    w1t = pad2(jnp.asarray(w1, jnp.float32).T, V1, H1p).astype(compute_dtype)
    w2t = pad2(jnp.asarray(w2, jnp.float32).T, H1p, H2p).astype(compute_dtype)
    w3t = pad2(jnp.asarray(w3, jnp.float32).T, H2p, Op).astype(compute_dtype)

    b1r = jnp.pad(jnp.asarray(b1, jnp.float32), (0, H1p - H1)).reshape(1, H1p)
    b2r = jnp.pad(jnp.asarray(b2, jnp.float32), (0, H2p - H2)).reshape(1, H2p)
    b3r = jnp.pad(jnp.asarray(b3, jnp.float32), (0, Op - O)).reshape(1, Op)

    return dict(w1t=w1t, b1r=b1r, w2t=w2t, b2r=b2r, w3t=w3t, b3r=b3r,
                out_dim=O, compute_dtype=compute_dtype)


def dbn_forward(x, prepared, *, batch_tile=256):
    """Fused DBN forward. x: [B, n_visible1] (any dtype), prepared = prepare_params(...)."""
    w1t, b1r = prepared["w1t"], prepared["b1r"]
    w2t, b2r = prepared["w2t"], prepared["b2r"]
    w3t, b3r = prepared["w3t"], prepared["b3r"]
    out_dim = prepared["out_dim"]
    cdt = prepared["compute_dtype"]

    B, V1 = x.shape
    H1p, H2p, Op = w1t.shape[1], w2t.shape[1], w3t.shape[1]

    # Batch tile: cap at 256 rows (fits v7x's 64 MiB VMEM / 32 MiB scoped default
    # with double-buffered x/out tiles + resident weights with huge headroom).
    TB = min(batch_tile, _round_up(B, SUBLANE))
    Bp = _round_up(B, TB)

    xc = jnp.asarray(x, jnp.float32)
    if Bp != B:
        xc = jnp.pad(xc, ((0, Bp - B), (0, 0)))
    xc = xc.astype(cdt)

    grid = (Bp // TB,)

    def const_spec(shape):
        # Weights/biases: same block every grid step -> stay VMEM-resident.
        return pl.BlockSpec(shape, lambda i: (0,) * len(shape))

    itemsz = jnp.dtype(cdt).itemsize
    flops = 2 * Bp * (V1 * H1p + H1p * H2p + H2p * Op)
    transcendentals = Bp * (H1p + H2p + Op)
    bytes_accessed = (Bp * V1 * itemsz
                      + (w1t.size + w2t.size + w3t.size) * itemsz
                      + (b1r.size + b2r.size + b3r.size) * 4
                      + Bp * Op * 4)

    out_padded = pl.pallas_call(
        dbn_kernel,
        out_shape=jax.ShapeDtypeStruct((Bp, Op), jnp.float32),
        grid=grid,
        in_specs=[
            pl.BlockSpec((TB, V1), lambda i: (i, 0)),   # x: tiled over batch
            const_spec(w1t.shape),
            const_spec(b1r.shape),
            const_spec(w2t.shape),
            const_spec(b2r.shape),
            const_spec(w3t.shape),
            const_spec(b3r.shape),
        ],
        out_specs=pl.BlockSpec((TB, Op), lambda i: (i, 0)),
        compiler_params=pltpu.CompilerParams(
            dimension_semantics=("parallel",),   # let v7x's 2 TCs split the batch
        ),
        cost_estimate=pl.CostEstimate(
            flops=flops,
            transcendentals=transcendentals,
            bytes_accessed=bytes_accessed,
        ),
    )(xc, w1t, b1r, w2t, b2r, w3t, b3r)

    # Strip batch / lane padding.
    return out_padded[:B, :out_dim]


def dbn_reference(x, params):
    h1 = jax.nn.sigmoid(x @ params["fc1_w"].T + params["fc1_b"])
    h2 = jax.nn.sigmoid(h1 @ params["fc2_w"].T + params["fc2_b"])
    return jax.nn.sigmoid(h2 @ params["out_w"].T + params["out_b"])


if __name__ == "__main__":
    # Small shapes consistent with the module:
    #   rbm1: n_visible=32, n_hidden=64 ; rbm2: n_visible=64, n_hidden=32 ; output_dim=16
    B, n_vis1, n_hid1, n_hid2, out_dim = 8, 32, 64, 32, 16

    key = jax.random.PRNGKey(0)
    k_x, k1, k2, k3, kb1, kb2, kb3 = jax.random.split(key, 7)

    x = jax.random.normal(k_x, (B, n_vis1), jnp.float32)
    params = {
        "fc1_w": 0.1 * jax.random.normal(k1, (n_hid1, n_vis1), jnp.float32),
        "fc1_b": 0.1 * jax.random.normal(kb1, (n_hid1,), jnp.float32),
        "fc2_w": 0.1 * jax.random.normal(k2, (n_hid2, n_hid1), jnp.float32),
        "fc2_b": 0.1 * jax.random.normal(kb2, (n_hid2,), jnp.float32),
        "out_w": 0.1 * jax.random.normal(k3, (out_dim, n_hid2), jnp.float32),
        "out_b": 0.1 * jax.random.normal(kb3, (out_dim,), jnp.float32),
    }

    # One-time weight layout prep; per-call path only touches x.
    prepared = prepare_params(params)
    fwd = jax.jit(functools.partial(dbn_forward, prepared=prepared))

    out = jax.block_until_ready(fwd(x))
    ref = jax.block_until_ready(dbn_reference(x, params))

    assert out.shape == (B, out_dim), out.shape
    # bf16 matmul operands with f32 accumulation -> tolerance loosened vs f32 ref.
    max_err = float(jnp.max(jnp.abs(out - ref)))
    assert jnp.allclose(out, ref, atol=2e-2, rtol=2e-2), max_err
    print("KERNEL_OK")
</pallas_src>

<mosaic_0001>
module attributes {stable_mosaic.version = 11 : i64} {
  func.func @dbn_kernel(%arg0: i32, %arg1: memref<8x32xbf16, #tpu.memory_space<vmem>>, %arg2: memref<32x128xbf16, #tpu.memory_space<vmem>>, %arg3: memref<1x128xf32, #tpu.memory_space<vmem>>, %arg4: memref<128x128xbf16, #tpu.memory_space<vmem>>, %arg5: memref<1x128xf32, #tpu.memory_space<vmem>>, %arg6: memref<128x128xbf16, #tpu.memory_space<vmem>>, %arg7: memref<1x128xf32, #tpu.memory_space<vmem>>, %arg8: memref<8x128xf32, #tpu.memory_space<vmem>>) attributes {dimension_semantics = [#tpu.dimension_semantics<parallel>], iteration_bounds = array<i64: 1>, scalar_prefetch = 0 : i64, scratch_operands = 0 : i64, tpu.core_type = #tpu.core_type<tc>, window_params = [{transform_indices = @transform_0, window_bounds = array<i64: 8, 32>}, {pipeline_mode = #tpu.pipeline_mode<synchronous>, transform_indices = @transform_1, window_bounds = array<i64: 32, 128>}, {pipeline_mode = #tpu.pipeline_mode<synchronous>, transform_indices = @transform_2, window_bounds = array<i64: 1, 128>}, {pipeline_mode = #tpu.pipeline_mode<synchronous>, transform_indices = @transform_3, window_bounds = array<i64: 128, 128>}, {pipeline_mode = #tpu.pipeline_mode<synchronous>, transform_indices = @transform_4, window_bounds = array<i64: 1, 128>}, {pipeline_mode = #tpu.pipeline_mode<synchronous>, transform_indices = @transform_5, window_bounds = array<i64: 128, 128>}, {pipeline_mode = #tpu.pipeline_mode<synchronous>, transform_indices = @transform_6, window_bounds = array<i64: 1, 128>}, {transform_indices = @transform_7, window_bounds = array<i64: 8, 128>}]} {
    %c0 = arith.constant 0 : index
    %c0_0 = arith.constant 0 : index
    %0 = vector.load %arg1[%c0, %c0_0] : memref<8x32xbf16, #tpu.memory_space<vmem>>, vector<8x32xbf16>
    %c0_1 = arith.constant 0 : index
    %c0_2 = arith.constant 0 : index
    %1 = vector.load %arg2[%c0_1, %c0_2] : memref<32x128xbf16, #tpu.memory_space<vmem>>, vector<32x128xbf16>
    %cst = arith.constant dense<0.000000e+00> : vector<8x128xf32>
    %2 = tpu.matmul %0, %1, %cst {dimension_numbers = #tpu.dot_dimension_numbers<[1], [0], [0], [1], [0, 0, 1, 1], [], []>} : vector<8x32xbf16>, vector<32x128xbf16>, vector<8x128xf32> -> vector<8x128xf32>
    %c0_3 = arith.constant 0 : index
    %c0_4 = arith.constant 0 : index
    %3 = vector.load %arg3[%c0_3, %c0_4] : memref<1x128xf32, #tpu.memory_space<vmem>>, vector<1x128xf32>
    %4 = vector.broadcast %3 : vector<1x128xf32> to vector<8x128xf32>
    %5 = arith.addf %2, %4 : vector<8x128xf32>
    %6 = arith.negf %5 : vector<8x128xf32>
    %7 = math.exp %6 : vector<8x128xf32>
    %cst_5 = arith.constant 1.000000e+00 : f32
    %8 = vector.broadcast %cst_5 : f32 to vector<8x128xf32>
    %9 = arith.addf %8, %7 : vector<8x128xf32>
    %10 = arith.divf %8, %9 : vector<8x128xf32>
    %11 = arith.truncf %10 : vector<8x128xf32> to vector<8x128xbf16>
    %c0_6 = arith.constant 0 : index
    %c0_7 = arith.constant 0 : index
    %12 = vector.load %arg4[%c0_6, %c0_7] : memref<128x128xbf16, #tpu.memory_space<vmem>>, vector<128x128xbf16>
    %cst_8 = arith.constant dense<0.000000e+00> : vector<8x128xf32>
    %13 = tpu.matmul %11, %12, %cst_8 {dimension_numbers = #tpu.dot_dimension_numbers<[1], [0], [0], [1], [0, 0, 1, 1], [], []>} : vector<8x128xbf16>, vector<128x128xbf16>, vector<8x128xf32> -> vector<8x128xf32>
    %c0_9 = arith.constant 0 : index
    %c0_10 = arith.constant 0 : index
    %14 = vector.load %arg5[%c0_9, %c0_10] : memref<1x128xf32, #tpu.memory_space<vmem>>, vector<1x128xf32>
    %15 = vector.broadcast %14 : vector<1x128xf32> to vector<8x128xf32>
    %16 = arith.addf %13, %15 : vector<8x128xf32>
    %17 = arith.negf %16 : vector<8x128xf32>
    %18 = math.exp %17 : vector<8x128xf32>
    %cst_11 = arith.constant 1.000000e+00 : f32
    %19 = vector.broadcast %cst_11 : f32 to vector<8x128xf32>
    %20 = arith.addf %19, %18 : vector<8x128xf32>
    %21 = arith.divf %19, %20 : vector<8x128xf32>
    %22 = arith.truncf %21 : vector<8x128xf32> to vector<8x128xbf16>
    %c0_12 = arith.constant 0 : index
    %c0_13 = arith.constant 0 : index
    %23 = vector.load %arg6[%c0_12, %c0_13] : memref<128x128xbf16, #tpu.memory_space<vmem>>, vector<128x128xbf16>
    %cst_14 = arith.constant dense<0.000000e+00> : vector<8x128xf32>
    %24 = tpu.matmul %22, %23, %cst_14 {dimension_numbers = #tpu.dot_dimension_numbers<[1], [0], [0], [1], [0, 0, 1, 1], [], []>} : vector<8x128xbf16>, vector<128x128xbf16>, vector<8x128xf32> -> vector<8x128xf32>
    %c0_15 = arith.constant 0 : index
    %c0_16 = arith.constant 0 : index
    %25 = vector.load %arg7[%c0_15, %c0_16] : memref<1x128xf32, #tpu.memory_space<vmem>>, vector<1x128xf32>
    %26 = vector.broadcast %25 : vector<1x128xf32> to vector<8x128xf32>
    %27 = arith.addf %24, %26 : vector<8x128xf32>
    %28 = arith.negf %27 : vector<8x128xf32>
    %29 = math.exp %28 : vector<8x128xf32>
    %cst_17 = arith.constant 1.000000e+00 : f32
    %30 = vector.broadcast %cst_17 : f32 to vector<8x128xf32>
    %31 = arith.addf %30, %29 : vector<8x128xf32>
    %32 = arith.divf %30, %31 : vector<8x128xf32>
    %c0_18 = arith.constant 0 : index
    %c0_19 = arith.constant 0 : index
    %33 = vector.load %arg8[%c0_18, %c0_19] : memref<8x128xf32, #tpu.memory_space<vmem>>, vector<8x128xf32>
    tpu.vector_store %arg8[%c0_18, %c0_19], %32 {strides = array<i32>} : memref<8x128xf32, #tpu.memory_space<vmem>>, vector<8x128xf32>,
    return
  }
  func.func @transform_0(%arg0: i32) -> (i32, i32) {
    %c0_i32 = arith.constant 0 : i32
    %c0_i32_0 = arith.constant 0 : i32
    return %arg0, %c0_i32 : i32, i32
  }
  func.func @transform_1(%arg0: i32) -> (i32, i32) {
    %c0_i32 = arith.constant 0 : i32
    %c0_i32_0 = arith.constant 0 : i32
    %c0_i32_1 = arith.constant 0 : i32
    return %c0_i32, %c0_i32_0 : i32, i32
  }
  func.func @transform_2(%arg0: i32) -> (i32, i32) {
    %c0_i32 = arith.constant 0 : i32
    %c0_i32_0 = arith.constant 0 : i32
    %c0_i32_1 = arith.constant 0 : i32
    return %c0_i32, %c0_i32_0 : i32, i32
  }
  func.func @transform_3(%arg0: i32) -> (i32, i32) {
    %c0_i32 = arith.constant 0 : i32
    %c0_i32_0 = arith.constant 0 : i32
    %c0_i32_1 = arith.constant 0 : i32
    return %c0_i32, %c0_i32_0 : i32, i32
  }
  func.func @transform_4(%arg0: i32) -> (i32, i32) {
    %c0_i32 = arith.constant 0 : i32
    %c0_i32_0 = arith.constant 0 : i32
    %c0_i32_1 = arith.constant 0 : i32
    return %c0_i32, %c0_i32_0 : i32, i32
  }
  func.func @transform_5(%arg0: i32) -> (i32, i32) {
    %c0_i32 = arith.constant 0 : i32
    %c0_i32_0 = arith.constant 0 : i32
    %c0_i32_1 = arith.constant 0 : i32
    return %c0_i32, %c0_i32_0 : i32, i32
  }
  func.func @transform_6(%arg0: i32) -> (i32, i32) {
    %c0_i32 = arith.constant 0 : i32
    %c0_i32_0 = arith.constant 0 : i32
    %c0_i32_1 = arith.constant 0 : i32
    return %c0_i32, %c0_i32_0 : i32, i32
  }
  func.func @transform_7(%arg0: i32) -> (i32, i32) {
    %c0_i32 = arith.constant 0 : i32
    %c0_i32_0 = arith.constant 0 : i32
    return %arg0, %c0_i32 : i32, i32
  }
}

</mosaic_0001>

<llo_original>
// kernel: dbn_forward.1
$region0: #{dbn_forward.1}
  #allocation0 [shape = 'u32[]', space=smem, size = 0x4, offset = 0x4, fixed_abs, tag = 'smem constant byte address 0x4 - core index']
  #allocation1 [shape = 'u32[144,128]{1,0:T(1,128)}', space=vmem, size = 0x12000, scoped, tag = 'internal scratch']
  %s0 = inlined_call_operand.vmem [shape: bf16[8,32], index: 0, kind: input, shape index: {}]
  %s1 = inlined_call_operand.vmem [shape: bf16[32,128], index: 1, kind: input, shape index: {}]
  %s2 = inlined_call_operand.vmem [shape: f32[1,128], index: 2, kind: input, shape index: {}]
  %s3 = inlined_call_operand.hbm [shape: bf16[128,128], index: 3, kind: input, shape index: {}]
  %s4 = inlined_call_operand.vmem [shape: f32[1,128], index: 4, kind: input, shape index: {}]
  %s5 = inlined_call_operand.hbm [shape: bf16[128,128], index: 5, kind: input, shape index: {}]
  %s6 = inlined_call_operand.vmem [shape: f32[1,128], index: 6, kind: input, shape index: {}]
  %s7 = inlined_call_operand.hbm [shape: f32[8,128], index: 7, kind: output, shape index: {}]
  %s8 = sld [smem:[#allocation0]]
  $region46: #{dbn_forward.1} parent=0
    _
  %s10 = ssub.s32 1, %s8
  %s11 = scalar_select 0, %s10, %s8
  $region1: #{dbn_forward.1} parent=0
    #allocation2 [shape = 'u8[32768]{0}', space=vmem, size = 0x8000, scoped, tag = 'input window, operand 3, single buffered']
    #allocation3 [shape = 's32[1]{0}', space=sflag, size = 0x4, scoped, tag = 'scoped memory for dbn_forward.1']
    #allocation4 [shape = 's32[1]{0}', space=sflag, size = 0x4, scoped, tag = 'scoped memory for dbn_forward.1']
    #allocation5 [shape = 'u8[32768]{0}', space=vmem, size = 0x8000, scoped, tag = 'input window, operand 5, single buffered']
    #allocation6 [shape = 's32[1]{0}', space=sflag, size = 0x4, scoped, tag = 'scoped memory for dbn_forward.1']
    #allocation7 [shape = 'u8[4096]{0}', space=vmem, size = 0x1000, scoped, tag = 'output window, operand 0, single buffered']
    %12 = vsyncpa [#allocation3], 0
    %13 = vsyncpa [#allocation6], 0
    %14 = vsyncpa [#allocation4], 0
    // Predicated region
    $region2: #{dbn_forward.1} parent=1 // pred_check
      _
    $region3: #{dbn_forward.1} parent=1 // pred_check_branch
      %16 = sbr.rel (0) target = $region5
    $region4: #{dbn_forward.1} parent=1 // pred_region
      _
    $region5: #{dbn_forward.1} parent=1 // pred_fallthru
      _
    // Predicated region
    $region6: #{dbn_forward.1} parent=1 // pred_check
      _
    $region7: #{dbn_forward.1} parent=1 // pred_check_branch
      %18 = sbr.rel (0) target = $region9
    $region8: #{dbn_forward.1} parent=1 // pred_region
      _
    $region9: #{dbn_forward.1} parent=1 // pred_fallthru
      _
    // Predicated region
    $region10: #{dbn_forward.1} parent=1 // pred_check
      _
    $region11: #{dbn_forward.1} parent=1 // pred_check_branch
      %20 = sbr.rel (0) target = $region13
    $region12: #{dbn_forward.1} parent=1 // pred_region
      _
    $region13: #{dbn_forward.1} parent=1 // pred_fallthru
      _
    // Predicated region
    $region14: #{dbn_forward.1} parent=1 // pred_check
      _
    $region15: #{dbn_forward.1} parent=1 // pred_check_branch
      %22 = sbr.rel (0) target = $region17
    $region16: #{dbn_forward.1} parent=1 // pred_region
      %s24 = ssub.s32 1024, 1024
      %25 = vsyncadd [#allocation3], %s24
      %s26 = sshll.u32 [#allocation2], 4
      %s27 = int_to_ptr.vmem [resolvable:$true] %s26
      %32 = dma.hbm_to_vmem [thread:$0]  %s3, 1024, %s27, [#allocation3], 64, 64, 4
    $region17: #{dbn_forward.1} parent=1 // pred_fallthru
      _
    // Predicated region
    $region18: #{dbn_forward.1} parent=1 // pred_check
      _
    $region19: #{dbn_forward.1} parent=1 // pred_check_branch
      %34 = sbr.rel (0) target = $region21
    $region20: #{dbn_forward.1} parent=1 // pred_region
      _
    $region21: #{dbn_forward.1} parent=1 // pred_fallthru
      _
    // Predicated region
    $region22: #{dbn_forward.1} parent=1 // pred_check
      _
    $region23: #{dbn_forward.1} parent=1 // pred_check_branch
      %36 = sbr.rel (0) target = $region25
    $region24: #{dbn_forward.1} parent=1 // pred_region
      %s38 = ssub.s32 1024, 1024
      %39 = vsyncadd [#allocation6], %s38
      %s40 = sshll.u32 [#allocation5], 4
      %s41 = int_to_ptr.vmem [resolvable:$true] %s40
      %46 = dma.hbm_to_vmem [thread:$0]  %s5, 1024, %s41, [#allocation6], 64, 64, 4
    $region25: #{dbn_forward.1} parent=1 // pred_fallthru
      _
    // Predicated region
    $region26: #{dbn_forward.1} parent=1 // pred_check
      _
    $region27: #{dbn_forward.1} parent=1 // pred_check_branch
      %48 = sbr.rel (0) target = $region29
    $region28: #{dbn_forward.1} parent=1 // pred_region
      _
    $region29: #{dbn_forward.1} parent=1 // pred_fallthru
      _
    // Predicated region
    $region30: #{dbn_forward.1} parent=1 // pred_check
      _
    $region31: #{dbn_forward.1} parent=1 // pred_check_branch
      %50 = sbr.rel (0) target = $region33
    $region32: #{dbn_forward.1} parent=1 // pred_region
      %51 = dma.done [#allocation3], 1024
    $region33: #{dbn_forward.1} parent=1 // pred_fallthru
      _
    // Predicated region
    $region34: #{dbn_forward.1} parent=1 // pred_check
      _
    $region35: #{dbn_forward.1} parent=1 // pred_check_branch
      %53 = sbr.rel (0) target = $region37
    $region36: #{dbn_forward.1} parent=1 // pred_region
      %54 = dma.done [#allocation6], 1024
    $region37: #{dbn_forward.1} parent=1 // pred_fallthru
      _
    %v56 = vld [vmem:[%s0] sm:$0xf]
    %v57 = vld [vmem:[%s1] sm:$0xf]
    %v58 = vld [vmem:[%s1 + $0x4] sm:$0xf]
    %v59 = vld [vmem:[%s1 + $0x8] sm:$0xf]
    %v60 = vld [vmem:[%s1 + $0xc] sm:$0xf]
    %v61 = vld [vmem:[%s2] sm:$0x1]
    %v63 = vlaneseq
    %v64 = vshrl.u32 %v63, 7
    %v65 = vsub.s32 0, %v64
    %v66 = vrot.slane %v61, %v65
    %v72 = vunpack.c.l.b16 %v57
    %v73 = vunpack.c.l.b16 %v58
    %v74 = vunpack.c.l.b16 %v59
    %v75 = vunpack.c.l.b16 %v60
    %v76 = vpack.c.b16 %v73, %v72
    %v77 = vpack.c.b16 %v75, %v74
    %vm80 = vcmask 261120
    %v82 = vsel %vm80, %v56, 0
    %84 = vmatprep.subr.bf16.mxu0 0
    %85 = vmatpush1.bf16.msra.mxu0 %v76
    %86 = vmatprep.subr.bf16.mxu0 0
    %87 = vmatpush1.bf16.msra.mxu0 %v77
    %88 = vmatprep.subr.bf16.mxu0 0
    %89 = vmatpush1.bf16.msra.mxu0 0
    %90 = vmatprep.subr.bf16.mxu0 0
    %91 = vmatpush1.bf16.msra.mxu0 0
    %92 = vmatprep.subr.bf16.mxu0 0
    %93 = vmatpush1.bf16.msra.mxu0 0
    %94 = vmatprep.subr.bf16.mxu0 0
    %95 = vmatpush1.bf16.msra.mxu0 0
    %96 = vmatprep.subr.bf16.mxu0 0
    %97 = vmatpush1.bf16.msra.mxu0 0
    %98 = vmatprep.subr.bf16.mxu0 0
    %99 = vmatpush1.bf16.msra.mxu0 0
    %100 = vmatprep.subr.bf16.mxu0 0
    %101 = vmatpush1.bf16.msra.mxu0 0
    %102 = vmatprep.subr.bf16.mxu0 0
    %103 = vmatpush1.bf16.msra.mxu0 0
    %104 = vmatprep.subr.bf16.mxu0 0
    %105 = vmatpush1.bf16.msra.mxu0 0
    %106 = vmatprep.subr.bf16.mxu0 0
    %107 = vmatpush1.bf16.msra.mxu0 0
    %108 = vmatprep.subr.bf16.mxu0 0
    %109 = vmatpush1.bf16.msra.mxu0 0
    %110 = vmatprep.subr.bf16.mxu0 0
    %111 = vmatpush1.bf16.msra.mxu0 0
    %112 = vmatprep.subr.bf16.mxu0 0
    %113 = vmatpush1.bf16.msra.mxu0 0
    %114 = vmatprep.subr.bf16.mxu0 0
    %115 = vmatpush1.bf16.msra.mxu0 0
    %116 = vmatprep.mubr.bf16.mxu0 0
    %117 = vmatmul.mubr.bf16.gmra.mrb[0].mxu0 %v82
    %v118 = vpop.f32.mrb[0].mxu0
    %v119 = vadd.f32 %v66, %v118
    %v120 = vpop.f32.mrb[0].mxu0
    %v121 = vpop.f32.mrb[0].mxu0
    %v122 = vpop.f32.mrb[0].mxu0
    %123 = vdwg.mxu0
    %v124 = vxor.u32 %v119, 2147483648
    %v125 = vmul.f32 %v124, 1.442695
    %v126 = vpow.pop %v125
    %v127 = vadd.f32 %v126, 1.0
    %v128 = vrcp.pop %v127
    %v129 = vmul.f32 1.0, %v128
    %v130 = vpack.c.bf16 %v129, %v129
    %v131 = vld [vmem:[#allocation2] sm:$0xf]
    %v132 = vld [vmem:[#allocation2 + $0x4] sm:$0xf]
    %v133 = vld [vmem:[#allocation2 + $0x8] sm:$0xf]
    %v134 = vld [vmem:[#allocation2 + $0xc] sm:$0xf]
    %v135 = vld [vmem:[#allocation2 + $0x10] sm:$0xf]
    %v136 = vld [vmem:[#allocation2 + $0x14] sm:$0xf]
    %v137 = vld [vmem:[#allocation2 + $0x18] sm:$0xf]
    %v138 = vld [vmem:[#allocation2 + $0x1c] sm:$0xf]
    %v139 = vld [vmem:[#allocation2 + $0x20] sm:$0xf]
    %v140 = vld [vmem:[#allocation2 + $0x24] sm:$0xf]
    %v141 = vld [vmem:[#allocation2 + $0x28] sm:$0xf]
    %v142 = vld [vmem:[#allocation2 + $0x2c] sm:$0xf]
    %v143 = vld [vmem:[#allocation2 + $0x30] sm:$0xf]
    %v144 = vld [vmem:[#allocation2 + $0x34] sm:$0xf]
    %v145 = vld [vmem:[#allocation2 + $0x38] sm:$0xf]
    %v146 = vld [vmem:[#allocation2 + $0x3c] sm:$0xf]
    %v147 = vld [vmem:[%s4] sm:$0x1]
    %v149 = vlaneseq
    %v150 = vshrl.u32 %v149, 7
    %v151 = vsub.s32 0, %v150
    %v152 = vrot.slane %v147, %v151
    %v170 = vunpack.c.l.b16 %v131
    %v171 = vunpack.c.l.b16 %v132
    %v172 = vunpack.c.l.b16 %v133
    %v173 = vunpack.c.l.b16 %v134
    %v174 = vunpack.c.l.b16 %v135
    %v175 = vunpack.c.l.b16 %v136
    %v176 = vunpack.c.l.b16 %v137
    %v177 = vunpack.c.l.b16 %v138
    %v178 = vunpack.c.l.b16 %v139
    %v179 = vunpack.c.l.b16 %v140
    %v180 = vunpack.c.l.b16 %v141
    %v181 = vunpack.c.l.b16 %v142
    %v182 = vunpack.c.l.b16 %v143
    %v183 = vunpack.c.l.b16 %v144
    %v184 = vunpack.c.l.b16 %v145
    %v185 = vunpack.c.l.b16 %v146
    %v186 = vpack.c.b16 %v171, %v170
    %v187 = vpack.c.b16 %v173, %v172
    %v188 = vpack.c.b16 %v175, %v174
    %v189 = vpack.c.b16 %v177, %v176
    %v190 = vpack.c.b16 %v179, %v178
    %v191 = vpack.c.b16 %v181, %v180
    %v192 = vpack.c.b16 %v183, %v182
    %v193 = vpack.c.b16 %v185, %v184
    %202 = vmatprep.subr.bf16.mxu0 0
    %203 = vmatpush1.bf16.msra.mxu0 %v186
    %204 = vmatprep.subr.bf16.mxu0 0
    %205 = vmatpush1.bf16.msra.mxu0 %v187
    %206 = vmatprep.subr.bf16.mxu0 0
    %207 = vmatpush1.bf16.msra.mxu0 %v188
    %208 = vmatprep.subr.bf16.mxu0 0
    %209 = vmatpush1.bf16.msra.mxu0 %v189
    %210 = vmatprep.subr.bf16.mxu0 0
    %211 = vmatpush1.bf16.msra.mxu0 %v190
    %212 = vmatprep.subr.bf16.mxu0 0
    %213 = vmatpush1.bf16.msra.mxu0 %v191
    %214 = vmatprep.subr.bf16.mxu0 0
    %215 = vmatpush1.bf16.msra.mxu0 %v192
    %216 = vmatprep.subr.bf16.mxu0 0
    %217 = vmatpush1.bf16.msra.mxu0 %v193
    %218 = vmatprep.subr.bf16.mxu0 0
    %219 = vmatpush1.bf16.msra.mxu0 0
    %220 = vmatprep.subr.bf16.mxu0 0
    %221 = vmatpush1.bf16.msra.mxu0 0
    %222 = vmatprep.subr.bf16.mxu0 0
    %223 = vmatpush1.bf16.msra.mxu0 0
    %224 = vmatprep.subr.bf16.mxu0 0
    %225 = vmatpush1.bf16.msra.mxu0 0
    %226 = vmatprep.subr.bf16.mxu0 0
    %227 = vmatpush1.bf16.msra.mxu0 0
    %228 = vmatprep.subr.bf16.mxu0 0
    %229 = vmatpush1.bf16.msra.mxu0 0
    %230 = vmatprep.subr.bf16.mxu0 0
    %231 = vmatpush1.bf16.msra.mxu0 0
    %232 = vmatprep.subr.bf16.mxu0 0
    %233 = vmatpush1.bf16.msra.mxu0 0
    %234 = vmatprep.mubr.bf16.mxu0 0
    %235 = vmatmul.mubr.bf16.gmra.mrb[0].mxu0 %v130
    %v236 = vpop.f32.mrb[0].mxu0
    %v237 = vadd.f32 %v152, %v236
    %v238 = vpop.f32.mrb[0].mxu0
    %v239 = vpop.f32.mrb[0].mxu0
    %v240 = vpop.f32.mrb[0].mxu0
    %241 = vdwg.mxu0
    %v242 = vxor.u32 %v237, 2147483648
    %v243 = vmul.f32 %v242, 1.442695
    %v244 = vpow.pop %v243
    %v245 = vadd.f32 %v244, 1.0
    %v246 = vrcp.pop %v245
    %v247 = vmul.f32 1.0, %v246
    %v248 = vpack.c.bf16 %v247, %v247
    %v249 = vld [vmem:[#allocation5] sm:$0xf]
    %v250 = vld [vmem:[#allocation5 + $0x4] sm:$0xf]
    %v251 = vld [vmem:[#allocation5 + $0x8] sm:$0xf]
    %v252 = vld [vmem:[#allocation5 + $0xc] sm:$0xf]
    %v253 = vld [vmem:[#allocation5 + $0x10] sm:$0xf]
    %v254 = vld [vmem:[#allocation5 + $0x14] sm:$0xf]
    %v255 = vld [vmem:[#allocation5 + $0x18] sm:$0xf]
    %v256 = vld [vmem:[#allocation5 + $0x1c] sm:$0xf]
    %v257 = vld [vmem:[#allocation5 + $0x20] sm:$0xf]
    %v258 = vld [vmem:[#allocation5 + $0x24] sm:$0xf]
    %v259 = vld [vmem:[#allocation5 + $0x28] sm:$0xf]
    %v260 = vld [vmem:[#allocation5 + $0x2c] sm:$0xf]
    %v261 = vld [vmem:[#allocation5 + $0x30] sm:$0xf]
    %v262 = vld [vmem:[#allocation5 + $0x34] sm:$0xf]
    %v263 = vld [vmem:[#allocation5 + $0x38] sm:$0xf]
    %v264 = vld [vmem:[#allocation5 + $0x3c] sm:$0xf]
    %v265 = vld [vmem:[%s6] sm:$0x1]
    %v267 = vlaneseq
    %v268 = vshrl.u32 %v267, 7
    %v269 = vsub.s32 0, %v268
    %v270 = vrot.slane %v265, %v269
    %v288 = vunpack.c.l.b16 %v249
    %v289 = vunpack.c.l.b16 %v250
    %v290 = vunpack.c.l.b16 %v251
    %v291 = vunpack.c.l.b16 %v252
    %v292 = vunpack.c.l.b16 %v253
    %v293 = vunpack.c.l.b16 %v254
    %v294 = vunpack.c.l.b16 %v255
    %v295 = vunpack.c.l.b16 %v256
    %v296 = vunpack.c.l.b16 %v257
    %v297 = vunpack.c.l.b16 %v258
    %v298 = vunpack.c.l.b16 %v259
    %v299 = vunpack.c.l.b16 %v260
    %v300 = vunpack.c.l.b16 %v261
    %v301 = vunpack.c.l.b16 %v262
    %v302 = vunpack.c.l.b16 %v263
    %v303 = vunpack.c.l.b16 %v264
    %v304 = vpack.c.b16 %v289, %v288
    %v305 = vpack.c.b16 %v291, %v290
    %v306 = vpack.c.b16 %v293, %v292
    %v307 = vpack.c.b16 %v295, %v294
    %v308 = vpack.c.b16 %v297, %v296
    %v309 = vpack.c.b16 %v299, %v298
    %v310 = vpack.c.b16 %v301, %v300
    %v311 = vpack.c.b16 %v303, %v302
    %320 = vmatprep.subr.bf16.mxu0 0
    %321 = vmatpush1.bf16.msra.mxu0 %v304
    %322 = vmatprep.subr.bf16.mxu0 0
    %323 = vmatpush1.bf16.msra.mxu0 %v305
    %324 = vmatprep.subr.bf16.mxu0 0
    %325 = vmatpush1.bf16.msra.mxu0 %v306
    %326 = vmatprep.subr.bf16.mxu0 0
    %327 = vmatpush1.bf16.msra.mxu0 %v307
    %328 = vmatprep.subr.bf16.mxu0 0
    %329 = vmatpush1.bf16.msra.mxu0 %v308
    %330 = vmatprep.subr.bf16.mxu0 0
    %331 = vmatpush1.bf16.msra.mxu0 %v309
    %332 = vmatprep.subr.bf16.mxu0 0
    %333 = vmatpush1.bf16.msra.mxu0 %v310
    %334 = vmatprep.subr.bf16.mxu0 0
    %335 = vmatpush1.bf16.msra.mxu0 %v311
    %336 = vmatprep.subr.bf16.mxu0 0
    %337 = vmatpush1.bf16.msra.mxu0 0
    %338 = vmatprep.subr.bf16.mxu0 0
    %339 = vmatpush1.bf16.msra.mxu0 0
    %340 = vmatprep.subr.bf16.mxu0 0
    %341 = vmatpush1.bf16.msra.mxu0 0
    %342 = vmatprep.subr.bf16.mxu0 0
    %343 = vmatpush1.bf16.msra.mxu0 0
    %344 = vmatprep.subr.bf16.mxu0 0
    %345 = vmatpush1.bf16.msra.mxu0 0
    %346 = vmatprep.subr.bf16.mxu0 0
    %347 = vmatpush1.bf16.msra.mxu0 0
    %348 = vmatprep.subr.bf16.mxu0 0
    %349 = vmatpush1.bf16.msra.mxu0 0
    %350 = vmatprep.subr.bf16.mxu0 0
    %351 = vmatpush1.bf16.msra.mxu0 0
    %352 = vmatprep.mubr.bf16.mxu0 0
    %353 = vmatmul.mubr.bf16.gmra.mrb[0].mxu0 %v248
    %v354 = vpop.f32.mrb[0].mxu0
    %v355 = vadd.f32 %v270, %v354
    %v356 = vpop.f32.mrb[0].mxu0
    %v357 = vpop.f32.mrb[0].mxu0
    %v358 = vpop.f32.mrb[0].mxu0
    %359 = vdwg.mxu0
    %v360 = vxor.u32 %v355, 2147483648
    %v361 = vmul.f32 %v360, 1.442695
    %v362 = vpow.pop %v361
    %v363 = vadd.f32 %v362, 1.0
    %v364 = vrcp.pop %v363
    %v365 = vmul.f32 1.0, %v364
    %366 = vst [vmem:[#allocation7] sm:$0xff] %v365
    // Predicated region
    $region38: #{dbn_forward.1} parent=1 // pred_check
      _
    $region39: #{dbn_forward.1} parent=1 // pred_check_branch
      %368 = sbr.rel (0) target = $region41
    $region40: #{dbn_forward.1} parent=1 // pred_region
      %s370 = ssub.s32 128, 128
      %371 = vsyncadd [#allocation4], %s370
      %s373 = sshll.u32 [#allocation7], 4
      %s374 = int_to_ptr.vmem [resolvable:$true] %s373
      %376 = dma.vmem_to_hbm [thread:$0]  %s374, 128, %s7, [#allocation4]
    $region41: #{dbn_forward.1} parent=1 // pred_fallthru
      _
    // Predicated region
    $region42: #{dbn_forward.1} parent=1 // pred_check
      _
    $region43: #{dbn_forward.1} parent=1 // pred_check_branch
      %378 = sbr.rel (0) target = $region45
    $region44: #{dbn_forward.1} parent=1 // pred_region
      %379 = dma.done [#allocation4], 128
    $region45: #{dbn_forward.1} parent=1 // pred_fallthru
      _
    %380 = vsyncpa [#allocation3], 1
    %381 = vsyncpa [#allocation6], 1
    %382 = vsyncpa [#allocation4], 1

</llo_original>
